<compile_context>
chip_gen: v5e
topology: v5e:2x2
jax: 0.10.0
libtpu: 0.0.40
codegen_flags: <defaults>
</compile_context>

<pallas_src>
import functools

import jax
import jax.numpy as jnp
from jax.experimental import pallas as pl
from jax.experimental.pallas import tpu as pltpu

LANES = 128
ACC_ROWS = 512          # fixed accumulator height (multiple of every packing)


def _sublanes_for(dtype):
    # Native sublane packing: 8 for 4-byte, 16 for 2-byte, 32 for 1-byte.
    return max(8, 32 // jnp.dtype(dtype).itemsize)


def _chip_config():
    """(ncores, block_rows_cap) chosen from the local device kind."""
    try:
        kind = jax.devices()[0].device_kind.lower()
    except Exception:  # pragma: no cover - defensive
        kind = ""
    if "v7" in kind:
        return 2, 8192      # 2 TCs; 2x2x4MiB inputs + small accs < 32MiB scoped
    if "v6" in kind:
        return 1, 8192      # 1 TC;  16.5MiB < 32MiB scoped default
    return 1, 4096          # v5e / unknown: 8.5MiB < 16MiB scoped default


def _dice_kernel(x_ref, t_ref, out_ref, acc_i_ref, acc_t_ref, *,
                 folds, acc_rows, activation):
    i = pl.program_id(1)

    @pl.when(i == 0)
    def _():
        acc_i_ref[...] = jnp.zeros_like(acc_i_ref)
        acc_t_ref[...] = jnp.zeros_like(acc_t_ref)

    # Process the (folds * acc_rows, 128) block in acc-sized chunks so
    # intermediates stay at <= 256 KiB of f32 (pure-VPU, hidden under DMA).
    for f in range(folds):
        sl = pl.ds(f * acc_rows, acc_rows)          # static start -> aligned
        x = x_ref[sl, :].astype(jnp.float32)
        t = t_ref[sl, :].astype(jnp.float32)
        if activation:
            x = jax.nn.sigmoid(x)
        acc_i_ref[...] += x * t                     # intersection partials
        acc_t_ref[...] += x + t                     # sum(x) + sum(t) partials

    @pl.when(i == pl.num_programs(1) - 1)
    def _():
        # Single small cross-lane reduce per core, only on the last step.
        out_ref[0, 0] = jnp.sum(acc_i_ref[...])
        out_ref[0, 1] = jnp.sum(acc_t_ref[...])


def dice_loss(inputs, targets, *, smooth=1.0, activation=True):
    """Pallas implementation of DiceLoss.forward (returns a float32 scalar).

    Pass the narrowest dtypes you have (bf16 logits, int8/bool targets are
    fine): the kernel is HBM-bound and upcasts to f32 on the VPU for free.
    """
    assert inputs.shape == targets.shape

    x = jnp.ravel(inputs)          # keep native dtype; cast happens in-kernel
    t = jnp.ravel(targets)
    n = x.shape[0]

    ncores, cap = _chip_config()
    sub = max(_sublanes_for(x.dtype), _sublanes_for(t.dtype))

    # Lane-dense slab: rows of 128 lanes, rounded to the packing sublanes.
    rows = -(-n // LANES)
    rows = ((rows + sub - 1) // sub) * sub

    rows_per_core = -(-rows // ncores)
    rows_per_core = ((rows_per_core + sub - 1) // sub) * sub
    block_rows = min(cap, rows_per_core)
    if block_rows > ACC_ROWS:
        # Align the block to the accumulator height (cap is already a multiple
        # of ACC_ROWS, so this never exceeds cap).
        block_rows = ((block_rows + ACC_ROWS - 1) // ACC_ROWS) * ACC_ROWS
        acc_rows = ACC_ROWS
    else:
        acc_rows = block_rows
    folds = block_rows // acc_rows

    chunk_rows = ncores * block_rows
    rows_pad = ((rows + chunk_rows - 1) // chunk_rows) * chunk_rows
    n_pad = rows_pad * LANES
    pad = n_pad - n
    if pad:
        x = jnp.pad(x, (0, pad))   # zeros in native dtype (single HBM pass)
        t = jnp.pad(t, (0, pad))

    x2d = x.reshape(rows_pad, LANES)
    t2d = t.reshape(rows_pad, LANES)
    inner_steps = rows_pad // chunk_rows
    grid = (ncores, inner_steps)

    kernel = functools.partial(
        _dice_kernel,
        folds=folds,
        acc_rows=acc_rows,
        activation=bool(activation),
    )

    data_spec = pl.BlockSpec(
        (block_rows, LANES), lambda c, i: (c * inner_steps + i, 0)
    )

    partials = pl.pallas_call(
        kernel,
        out_shape=jax.ShapeDtypeStruct((ncores, 2), jnp.float32),
        grid_spec=pltpu.PrefetchScalarGridSpec(
            num_scalar_prefetch=0,
            grid=grid,
            in_specs=[data_spec, data_spec],
            out_specs=pl.BlockSpec(
                (1, 2), lambda c, i: (c, 0),
                memory_space=pltpu.MemorySpace.SMEM,
            ),
            scratch_shapes=[
                pltpu.VMEM((acc_rows, LANES), jnp.float32),
                pltpu.VMEM((acc_rows, LANES), jnp.float32),
            ],
        ),
        compiler_params=pltpu.CompilerParams(
            dimension_semantics=("parallel", "arbitrary"),
        ),
    )(x2d, t2d)

    intersection = jnp.sum(partials[:, 0])
    total = jnp.sum(partials[:, 1])                 # sum(x) + sum(t) (padded)
    if activation and pad:
        # Padded inputs are zeros -> each contributes sigmoid(0) = 0.5 exactly
        # to sum(x); padded targets are 0 so the intersection is untouched.
        total = total - 0.5 * pad
    # (activation=False: padded x contributes 0, no correction needed.)
    dice = (2.0 * intersection + smooth) / (total + smooth)
    return (1.0 - dice).astype(jnp.float32)


def _reference(inputs, targets, smooth=1.0, activation=True):
    x = inputs.astype(jnp.float32)
    t = targets.astype(jnp.float32)
    if activation:
        x = jax.nn.sigmoid(x)
    xf = x.reshape(-1)
    tf = t.reshape(-1)
    intersection = jnp.sum(xf * tf)
    dice = (2.0 * intersection + smooth) / (jnp.sum(xf) + jnp.sum(tf) + smooth)
    return 1.0 - dice


if __name__ == "__main__":
    key = jax.random.PRNGKey(0)
    k1, k2 = jax.random.split(key)
    # NCHW logits and binary targets, small shapes.
    shape = (2, 4, 16, 16)
    inputs = jax.random.normal(k1, shape, dtype=jnp.float32)
    targets = (jax.random.uniform(k2, shape) > 0.5).astype(jnp.float32)

    loss = dice_loss(inputs, targets, smooth=1.0, activation=True)
    loss = jax.block_until_ready(loss)

    ref = jax.block_until_ready(_reference(inputs, targets))
    assert jnp.allclose(loss, ref, atol=1e-5, rtol=1e-5), (loss, ref)

    # Exercise a ragged (padded) size + no-activation path for correctness.
    n_odd = 3 * 1000 + 37
    xi = jax.random.normal(k1, (n_odd,), dtype=jnp.float32)
    ti = (jax.random.uniform(k2, (n_odd,)) > 0.5).astype(jnp.float32)
    for act in (True, False):
        l2 = jax.block_until_ready(dice_loss(xi, ti, activation=act))
        r2 = jax.block_until_ready(_reference(xi, ti, activation=act))
        assert jnp.allclose(l2, r2, atol=1e-5, rtol=1e-5), (act, l2, r2)

    print("KERNEL_OK")
</pallas_src>

<mosaic_0001>
module attributes {stable_mosaic.version = 11 : i64} {
  func.func @_dice_kernel(%arg0: i32, %arg1: i32, %arg2: memref<16x128xf32, #tpu.memory_space<vmem>>, %arg3: memref<16x128xf32, #tpu.memory_space<vmem>>, %arg4: memref<1x2xf32, #tpu.memory_space<smem>>, %arg5: memref<16x128xf32, #tpu.memory_space<vmem>>, %arg6: memref<16x128xf32, #tpu.memory_space<vmem>>) attributes {dimension_semantics = [#tpu.dimension_semantics<parallel>, #tpu.dimension_semantics<arbitrary>], iteration_bounds = array<i64: 1, 1>, scalar_prefetch = 0 : i64, scratch_operands = 2 : i64, tpu.core_type = #tpu.core_type<tc>, window_params = [{transform_indices = @transform_0, window_bounds = array<i64: 16, 128>}, {transform_indices = @transform_1, window_bounds = array<i64: 16, 128>}, {transform_indices = @transform_2, window_bounds = array<i64: 1, 2>}]} {
    %c0_i32 = arith.constant 0 : i32
    %0 = arith.cmpi eq, %arg1, %c0_i32 : i32
    %1 = arith.extui %0 : i1 to i32
    %c0_i32_0 = arith.constant 0 : i32
    %2 = arith.cmpi ne, %1, %c0_i32_0 : i32
    scf.if %2 {
      %cst_14 = arith.constant 0.000000e+00 : f32
      %21 = vector.broadcast %cst_14 : f32 to vector<16x128xf32>
      %c0_15 = arith.constant 0 : index
      %c0_16 = arith.constant 0 : index
      %22 = vector.load %arg5[%c0_15, %c0_16] : memref<16x128xf32, #tpu.memory_space<vmem>>, vector<16x128xf32>
      tpu.vector_store %arg5[%c0_15, %c0_16], %21 {strides = array<i32>} : memref<16x128xf32, #tpu.memory_space<vmem>>, vector<16x128xf32>,
      %cst_17 = arith.constant 0.000000e+00 : f32
      %23 = vector.broadcast %cst_17 : f32 to vector<16x128xf32>
      %c0_18 = arith.constant 0 : index
      %c0_19 = arith.constant 0 : index
      %24 = vector.load %arg6[%c0_18, %c0_19] : memref<16x128xf32, #tpu.memory_space<vmem>>, vector<16x128xf32>
      tpu.vector_store %arg6[%c0_18, %c0_19], %23 {strides = array<i32>} : memref<16x128xf32, #tpu.memory_space<vmem>>, vector<16x128xf32>,
    } else {
    }
    %c0 = arith.constant 0 : index
    %c0_1 = arith.constant 0 : index
    %3 = vector.load %arg2[%c0, %c0_1] : memref<16x128xf32, #tpu.memory_space<vmem>>, vector<16x128xf32>
    %c0_2 = arith.constant 0 : index
    %c0_3 = arith.constant 0 : index
    %4 = vector.load %arg3[%c0_2, %c0_3] : memref<16x128xf32, #tpu.memory_space<vmem>>, vector<16x128xf32>
    %5 = arith.negf %3 : vector<16x128xf32>
    %6 = math.exp %5 : vector<16x128xf32>
    %cst = arith.constant 1.000000e+00 : f32
    %7 = vector.broadcast %cst : f32 to vector<16x128xf32>
    %8 = arith.addf %7, %6 : vector<16x128xf32>
    %9 = arith.divf %7, %8 : vector<16x128xf32>
    %c0_4 = arith.constant 0 : index
    %c0_5 = arith.constant 0 : index
    %10 = vector.load %arg5[%c0_4, %c0_5] : memref<16x128xf32, #tpu.memory_space<vmem>>, vector<16x128xf32>
    %11 = arith.mulf %9, %4 : vector<16x128xf32>
    %12 = arith.addf %10, %11 : vector<16x128xf32>
    %c0_6 = arith.constant 0 : index
    %c0_7 = arith.constant 0 : index
    %13 = vector.load %arg5[%c0_6, %c0_7] : memref<16x128xf32, #tpu.memory_space<vmem>>, vector<16x128xf32>
    tpu.vector_store %arg5[%c0_6, %c0_7], %12 {strides = array<i32>} : memref<16x128xf32, #tpu.memory_space<vmem>>, vector<16x128xf32>,
    %c0_8 = arith.constant 0 : index
    %c0_9 = arith.constant 0 : index
    %14 = vector.load %arg6[%c0_8, %c0_9] : memref<16x128xf32, #tpu.memory_space<vmem>>, vector<16x128xf32>
    %15 = arith.addf %9, %4 : vector<16x128xf32>
    %16 = arith.addf %14, %15 : vector<16x128xf32>
    %c0_10 = arith.constant 0 : index
    %c0_11 = arith.constant 0 : index
    %17 = vector.load %arg6[%c0_10, %c0_11] : memref<16x128xf32, #tpu.memory_space<vmem>>, vector<16x128xf32>
    tpu.vector_store %arg6[%c0_10, %c0_11], %16 {strides = array<i32>} : memref<16x128xf32, #tpu.memory_space<vmem>>, vector<16x128xf32>,
    %c0_i32_12 = arith.constant 0 : i32
    %18 = arith.cmpi eq, %arg1, %c0_i32_12 : i32
    %19 = arith.extui %18 : i1 to i32
    %c0_i32_13 = arith.constant 0 : i32
    %20 = arith.cmpi ne, %19, %c0_i32_13 : i32
    scf.if %20 {
      %c0_14 = arith.constant 0 : index
      %c0_15 = arith.constant 0 : index
      %21 = vector.load %arg5[%c0_14, %c0_15] : memref<16x128xf32, #tpu.memory_space<vmem>>, vector<16x128xf32>
      %22 = vector.shape_cast %21 : vector<16x128xf32> to vector<1x16x128xf32>
      %cst_16 = arith.constant dense<0.000000e+00> : vector<1xf32>
      %23 = vector.multi_reduction <add>, %22, %cst_16 [1, 2] : vector<1x16x128xf32> to vector<1xf32>
      %24 = vector.shape_cast %23 : vector<1xf32> to vector<1x1x1xf32>
      %25 = vector.extract %24[0, 0, 0] : f32 from vector<1x1x1xf32>
      %c0_17 = arith.constant 0 : index
      %c0_18 = arith.constant 0 : index
      %26 = memref.load %arg4[%c0_17, %c0_18] : memref<1x2xf32, #tpu.memory_space<smem>>
      memref.store %25, %arg4[%c0_17, %c0_18] : memref<1x2xf32, #tpu.memory_space<smem>>
      %c0_19 = arith.constant 0 : index
      %c0_20 = arith.constant 0 : index
      %27 = vector.load %arg6[%c0_19, %c0_20] : memref<16x128xf32, #tpu.memory_space<vmem>>, vector<16x128xf32>
      %28 = vector.shape_cast %27 : vector<16x128xf32> to vector<1x16x128xf32>
      %cst_21 = arith.constant dense<0.000000e+00> : vector<1xf32>
      %29 = vector.multi_reduction <add>, %28, %cst_21 [1, 2] : vector<1x16x128xf32> to vector<1xf32>
      %30 = vector.shape_cast %29 : vector<1xf32> to vector<1x1x1xf32>
      %31 = vector.extract %30[0, 0, 0] : f32 from vector<1x1x1xf32>
      %c0_22 = arith.constant 0 : index
      %c1 = arith.constant 1 : index
      %32 = memref.load %arg4[%c0_22, %c1] : memref<1x2xf32, #tpu.memory_space<smem>>
      memref.store %31, %arg4[%c0_22, %c1] : memref<1x2xf32, #tpu.memory_space<smem>>
    } else {
    }
    return
  }
  func.func @transform_0(%arg0: i32, %arg1: i32) -> (i32, i32) {
    %c1_i32 = arith.constant 1 : i32
    %0 = arith.muli %arg0, %c1_i32 : i32
    %1 = arith.addi %0, %arg1 : i32
    %c0_i32 = arith.constant 0 : i32
    %c0_i32_0 = arith.constant 0 : i32
    return %1, %c0_i32 : i32, i32
  }
  func.func @transform_1(%arg0: i32, %arg1: i32) -> (i32, i32) {
    %c1_i32 = arith.constant 1 : i32
    %0 = arith.muli %arg0, %c1_i32 : i32
    %1 = arith.addi %0, %arg1 : i32
    %c0_i32 = arith.constant 0 : i32
    %c0_i32_0 = arith.constant 0 : i32
    return %1, %c0_i32 : i32, i32
  }
  func.func @transform_2(%arg0: i32, %arg1: i32) -> (i32, i32) {
    %c0_i32 = arith.constant 0 : i32
    %c0_i32_0 = arith.constant 0 : i32
    return %arg0, %c0_i32 : i32, i32
  }
}

</mosaic_0001>

<llo_original>
// kernel: tpu_custom_call.1
$region0: #{tpu_custom_call.1}
  #allocation0 [shape = 'u32[]', space=smem, size = 0x4, offset = 0x4, fixed_abs, tag = 'smem constant byte address 0x4 - core index']
  #allocation1 [shape = 'u32[72,128]{1,0:T(1,128)}', space=vmem, size = 0x9000, scoped, tag = 'internal scratch']
  #allocation2 [shape = 'f32[16,128]{1,0:T(8,128)}', space=vmem, size = 0x2000, scoped, tag = 'scratch operand']
  #allocation3 [shape = 'f32[16,128]{1,0:T(8,128)}', space=vmem, size = 0x2000, scoped, tag = 'scratch operand']
  %s0 = inlined_call_operand.hbm [shape: f32[16,128], index: 0, kind: input, shape index: {}]
  %s1 = inlined_call_operand.hbm [shape: f32[16,128], index: 1, kind: input, shape index: {}]
  %s2 = inlined_call_operand.hbm [shape: f32[1,2], index: 2, kind: output, shape index: {}]
  %s3 = sld [smem:[#allocation0]]
  $region34: #{tpu_custom_call.1} parent=0
    _
  %s5 = ssub.s32 1, %s3
  %s6 = scalar_select 0, %s5, %s3
  $region1: #{tpu_custom_call.1} parent=0
    #allocation4 [shape = 'u8[8192]{0}', space=vmem, size = 0x2000, scoped, tag = 'input window, operand 0, single buffered']
    #allocation5 [shape = 's32[1]{0}', space=sflag, size = 0x4, scoped, tag = 'scoped memory for tpu_custom_call.1']
    #allocation6 [shape = 's32[1]{0}', space=sflag, size = 0x4, scoped, tag = 'scoped memory for tpu_custom_call.1']
    #allocation7 [shape = 'u8[8192]{0}', space=vmem, size = 0x2000, scoped, tag = 'input window, operand 1, single buffered']
    #allocation8 [shape = 's32[1]{0}', space=sflag, size = 0x4, scoped, tag = 'scoped memory for tpu_custom_call.1']
    #allocation9 [shape = 'u8[512]{0}', space=smem, size = 0x200, scoped, tag = 'output window, operand 0, single buffered']
    %7 = vsyncpa [#allocation5], 0
    %8 = vsyncpa [#allocation8], 0
    %9 = vsyncpa [#allocation6], 0
    // Predicated region
    $region2: #{tpu_custom_call.1} parent=1 // pred_check
      _
    $region3: #{tpu_custom_call.1} parent=1 // pred_check_branch
      %11 = sbr.rel (0) target = $region5
    $region4: #{tpu_custom_call.1} parent=1 // pred_region
      %s12 = sadd.s32 0, 0
      %s13 = smul.u32 2, %s12
      %15 = vsyncadd [#allocation5], 0
      %s16 = smul.addr %s13, 8
      %s17 = scalar_lea.hbm %s0, %s16
      %s18 = sshll.u32 %s17, 4
      %s19 = int_to_ptr.hbm [resolvable:$true] %s18
      %s20 = sshll.u32 [#allocation4], 4
      %s21 = int_to_ptr.vmem [resolvable:$true] %s20
      %26 = dma.hbm_to_vmem [thread:$0]  %s19, 256, %s21, [#allocation5], 128, 128, 8
    $region5: #{tpu_custom_call.1} parent=1 // pred_fallthru
      _
    // Predicated region
    $region6: #{tpu_custom_call.1} parent=1 // pred_check
      _
    $region7: #{tpu_custom_call.1} parent=1 // pred_check_branch
      %28 = sbr.rel (0) target = $region9
    $region8: #{tpu_custom_call.1} parent=1 // pred_region
      %s29 = sadd.s32 0, 0
      %s30 = smul.u32 2, %s29
      %32 = vsyncadd [#allocation8], 0
      %s33 = smul.addr %s30, 8
      %s34 = scalar_lea.hbm %s1, %s33
      %s35 = sshll.u32 %s34, 4
      %s36 = int_to_ptr.hbm [resolvable:$true] %s35
      %s37 = sshll.u32 [#allocation7], 4
      %s38 = int_to_ptr.vmem [resolvable:$true] %s37
      %43 = dma.hbm_to_vmem [thread:$0]  %s36, 256, %s38, [#allocation8], 128, 128, 8
    $region9: #{tpu_custom_call.1} parent=1 // pred_fallthru
      _
    // Predicated region
    $region10: #{tpu_custom_call.1} parent=1 // pred_check
      _
    $region11: #{tpu_custom_call.1} parent=1 // pred_check_branch
      %45 = sbr.rel (0) target = $region13
    $region12: #{tpu_custom_call.1} parent=1 // pred_region
      %47 = dma.done [#allocation5], 256
    $region13: #{tpu_custom_call.1} parent=1 // pred_fallthru
      _
    // Predicated region
    $region14: #{tpu_custom_call.1} parent=1 // pred_check
      _
    $region15: #{tpu_custom_call.1} parent=1 // pred_check_branch
      %49 = sbr.rel (0) target = $region17
    $region16: #{tpu_custom_call.1} parent=1 // pred_region
      %51 = dma.done [#allocation8], 256
    $region17: #{tpu_custom_call.1} parent=1 // pred_fallthru
      _
    %s52 = sadd.s32 0, 0
    %s53 = smul.u32 2, %s52
    %s54 = sadd.s32 0, 0
    %s55 = smul.u32 2, %s54
    %p56 = scmp.eq.s32.totalorder 0, 0
    // Predicated region
    $region18: #{tpu_custom_call.1} parent=1 // pred_check
      %p57 = pneg %p56
    $region19: #{tpu_custom_call.1} parent=1 // pred_check_branch
      %59 = sbr.rel (%p57) target = $region21
    $region20: #{tpu_custom_call.1} parent=1 // pred_region
      %60 = vst [vmem:[#allocation2] sm:$0xff] 0.0
      %61 = vst [vmem:[#allocation2 + $0x8] sm:$0xff] 0.0
      %62 = vst [vmem:[#allocation3] sm:$0xff] 0.0
      %63 = vst [vmem:[#allocation3 + $0x8] sm:$0xff] 0.0
    $region21: #{tpu_custom_call.1} parent=1 // pred_fallthru
      _
    %v64 = vld [vmem:[#allocation4] sm:$0xff]
    %v65 = vld [vmem:[#allocation4 + $0x8] sm:$0xff]
    %v66 = vld [vmem:[#allocation7] sm:$0xff]
    %v67 = vld [vmem:[#allocation7 + $0x8] sm:$0xff]
    %v68 = vxor.u32 %v64, 2147483648
    %v69 = vxor.u32 %v65, 2147483648
    %v70 = vmul.f32 %v68, 1.442695
    %v71 = vpow.pop %v70
    %v72 = vmul.f32 %v69, 1.442695
    %v73 = vpow.pop %v72
    %v74 = vadd.f32 %v71, 1.0
    %v75 = vadd.f32 %v73, 1.0
    %v76 = vrcp.pop %v74
    %v77 = vmul.f32 %v74, %v76
    %v78 = vsub.f32 1.0, %v77
    %v79 = vmul.f32 %v76, %v78
    %v80 = vadd.f32 %v76, %v79
    %vm81 = vweird.f32 %v74
    %vm82 = vweird.f32 %v76
    %vm83 = vmor %vm81, %vm82
    %v84 = vsel %vm83, %v76, %v80
    %v85 = vand.u32 2147483647, %v74
    %vm86 = vcmp.eq.f32.partialorder %v85, 8.507059e+37
    %v87 = vand.u32 %v74, 2147483648
    %v88 = vor.u32 1.1754944e-38, %v87
    %v89 = vsel %vm86, %v88, %v84
    %v90 = vmul.f32 1.0, %v89
    %v91 = vrcp.pop %v75
    %v92 = vmul.f32 %v75, %v91
    %v93 = vsub.f32 1.0, %v92
    %v94 = vmul.f32 %v91, %v93
    %v95 = vadd.f32 %v91, %v94
    %vm96 = vweird.f32 %v75
    %vm97 = vweird.f32 %v91
    %vm98 = vmor %vm96, %vm97
    %v99 = vsel %vm98, %v91, %v95
    %v100 = vand.u32 2147483647, %v75
    %vm101 = vcmp.eq.f32.partialorder %v100, 8.507059e+37
    %v102 = vand.u32 %v75, 2147483648
    %v103 = vor.u32 1.1754944e-38, %v102
    %v104 = vsel %vm101, %v103, %v99
    %v105 = vmul.f32 1.0, %v104
    %v106 = vld [vmem:[#allocation2] sm:$0xff]
    %v107 = vld [vmem:[#allocation2 + $0x8] sm:$0xff]
    %v108 = vmul.f32 %v90, %v66
    %v109 = vmul.f32 %v105, %v67
    %v110 = vadd.f32 %v106, %v108
    %v111 = vadd.f32 %v107, %v109
    %112 = vst [vmem:[#allocation2] sm:$0xff] %v110
    %113 = vst [vmem:[#allocation2 + $0x8] sm:$0xff] %v111
    %v114 = vld [vmem:[#allocation3] sm:$0xff]
    %v115 = vld [vmem:[#allocation3 + $0x8] sm:$0xff]
    %v116 = vadd.f32 %v90, %v66
    %v117 = vadd.f32 %v105, %v67
    %v118 = vadd.f32 %v114, %v116
    %v119 = vadd.f32 %v115, %v117
    %120 = vst [vmem:[#allocation3] sm:$0xff] %v118
    %121 = vst [vmem:[#allocation3 + $0x8] sm:$0xff] %v119
    // Predicated region
    $region22: #{tpu_custom_call.1} parent=1 // pred_check
      %p122 = pneg %p56
    $region23: #{tpu_custom_call.1} parent=1 // pred_check_branch
      %124 = sbr.rel (%p122) target = $region25
    $region24: #{tpu_custom_call.1} parent=1 // pred_region
      %v125 = vld [vmem:[#allocation2] sm:$0xff]
      %v126 = vld [vmem:[#allocation2 + $0x8] sm:$0xff]
      %v127 = vadd.f32 %v125, %v126
      %128 = vadd.xlane.f32.xlu0 %v127
      %v129 = vpop.xlane.xlu0 %128
      %v130 = vrot.slane %v129, 4
      %v131 = vadd.f32 %v129, %v130
      %v132 = vrot.slane %v131, 2
      %v133 = vadd.f32 %v131, %v132
      %v134 = vrot.slane %v133, 1
      %v135 = vadd.f32 %v133, %v134
      %s136 = vtos %v135
      %s137 = scalar_lea.smem [#allocation9], 0
      %138 = sst [smem:[%s137]] %s136
      %v139 = vld [vmem:[#allocation3] sm:$0xff]
      %v140 = vld [vmem:[#allocation3 + $0x8] sm:$0xff]
      %v141 = vadd.f32 %v139, %v140
      %142 = vadd.xlane.f32.xlu0 %v141
      %v143 = vpop.xlane.xlu0 %142
      %v144 = vrot.slane %v143, 4
      %v145 = vadd.f32 %v143, %v144
      %v146 = vrot.slane %v145, 2
      %v147 = vadd.f32 %v145, %v146
      %v148 = vrot.slane %v147, 1
      %v149 = vadd.f32 %v147, %v148
      %s150 = vtos %v149
      %s151 = scalar_lea.smem [#allocation9], 1
      %152 = sst [smem:[%s151]] %s150
    $region25: #{tpu_custom_call.1} parent=1 // pred_fallthru
      _
    // Predicated region
    $region26: #{tpu_custom_call.1} parent=1 // pred_check
      _
    $region27: #{tpu_custom_call.1} parent=1 // pred_check_branch
      %154 = sbr.rel (0) target = $region29
    $region28: #{tpu_custom_call.1} parent=1 // pred_region
      %156 = vsyncadd [#allocation6], 0
      %s158 = sshll.u32 %s2, 4
      %s159 = int_to_ptr.hbm [resolvable:$true] %s158
      %161 = dma.smem_to_hbm [#allocation9], 16, %s159, [#allocation6]
    $region29: #{tpu_custom_call.1} parent=1 // pred_fallthru
      _
    // Predicated region
    $region30: #{tpu_custom_call.1} parent=1 // pred_check
      _
    $region31: #{tpu_custom_call.1} parent=1 // pred_check_branch
      %163 = sbr.rel (0) target = $region33
    $region32: #{tpu_custom_call.1} parent=1 // pred_region
      %165 = dma.done [#allocation6], 16
    $region33: #{tpu_custom_call.1} parent=1 // pred_fallthru
      _
    %166 = sfence
    %167 = vsyncpa [#allocation5], 1
    %168 = vsyncpa [#allocation8], 1
    %169 = vsyncpa [#allocation6], 1

</llo_original>
